<compile_context>
chip_gen: v6e
topology: v6e:2x2x1
jax: 0.10.0
libtpu: 0.0.40
codegen_flags: <defaults>
</compile_context>

<pallas_src>
import functools
import math

import jax
import jax.numpy as jnp
import numpy as np
from jax.experimental import pallas as pl
from jax.experimental.pallas import tpu as pltpu


def _round_up(x, m):
    return (x + m - 1) // m * m


# ----------------------------------------------------------------------------
# Kernel: per grid step compute (tile_m, K) @ (K, tile_n) on the MXU (bf16 in,
# f32 accumulate), apply the equalized scale and add the f32 bias row.
# tile_n is a multiple of 128 so every output store is lane-dense.
# ----------------------------------------------------------------------------
def eq_linear_kernel(x_ref, w_ref, b_ref, o_ref, *, scale):
    acc = jnp.dot(x_ref[...], w_ref[...], preferred_element_type=jnp.float32)
    o_ref[...] = acc * scale + b_ref[...]


# ----------------------------------------------------------------------------
# Wrapper: y = x @ (weight * 1/sqrt(in_features)).T + bias
# ----------------------------------------------------------------------------
@functools.partial(jax.jit, static_argnames=("tile_m", "tile_n"))
def equalized_linear_forward(x, weight, bias, *, tile_m=512, tile_n=512):
    out_f, in_f = weight.shape
    *lead, K = x.shape
    assert K == in_f, (K, in_f)

    c = 1.0 / math.sqrt(in_f)  # EqualizedWeight scale (applied in-kernel)

    # ---- glue: flatten leading dims, pad to TPU-friendly tiles.
    x2 = x.reshape(-1, K)
    M = x2.shape[0]

    Np = _round_up(out_f, 128)                                   # lane-dense columns
    w_mat = jnp.pad(weight.T, ((0, 0), (0, Np - out_f))).astype(jnp.bfloat16)   # (K, Np)
    b_pad = jnp.pad(bias.astype(jnp.float32), (0, Np - out_f)).reshape(1, Np)

    # tile_n: multiple of 128 (Np already is); tile_m: multiple of 8, clamped so
    # double-buffered (x, w, bias, out) tiles fit a conservative VMEM budget.
    tn = min(_round_up(tile_n, 128), Np)
    vmem_budget = 24 * 1024 * 1024
    fixed = 2 * (K * tn * 2 + tn * 4)                            # 2x-buf weight + bias tiles
    per_row = 2 * (K * 2 + tn * 4)                               # 2x-buf x(bf16) + out(f32) rows
    tm_cap = max(8, ((vmem_budget - fixed) // per_row) // 8 * 8)
    tm = min(tile_m, _round_up(M, 8), tm_cap)
    tm = max(8, (tm // 8) * 8)
    Mp = _round_up(M, tm)                                        # pad instead of asserting

    x_pad = jnp.pad(x2, ((0, Mp - M), (0, 0))).astype(jnp.bfloat16)

    out_pad = pl.pallas_call(
        functools.partial(eq_linear_kernel, scale=c),
        out_shape=jax.ShapeDtypeStruct((Mp, Np), jnp.float32),
        grid_spec=pltpu.PrefetchScalarGridSpec(
            num_scalar_prefetch=0,
            grid=(Mp // tm, Np // tn),
            in_specs=[
                pl.BlockSpec((tm, K), lambda i, j: (i, 0)),      # activations tile
                pl.BlockSpec((K, tn), lambda i, j: (0, j)),      # weight tile
                pl.BlockSpec((1, tn), lambda i, j: (0, j)),      # bias row tile
            ],
            out_specs=pl.BlockSpec((tm, tn), lambda i, j: (i, j)),
        ),
        compiler_params=pltpu.CompilerParams(
            dimension_semantics=("parallel", "parallel"),        # megacore sharding
            vmem_limit_bytes=32 * 1024 * 1024),
    )(x_pad, w_mat, b_pad)

    return out_pad[:M, :out_f].reshape(*lead, out_f)


# ----------------------------------------------------------------------------
# Pure-JAX references (for verification)
# ----------------------------------------------------------------------------
def reference_forward_f32(x, weight, bias):
    c = 1.0 / math.sqrt(weight.shape[1])
    return jnp.einsum("...k,nk->...n", x, weight * c) + bias


def reference_forward_bf16(x, weight, bias):
    # Same rounding as the kernel: bf16 MXU operands, f32 accumulate,
    # f32 scale + bias epilogue.
    c = 1.0 / math.sqrt(weight.shape[1])
    xb = x.astype(jnp.bfloat16).astype(jnp.float32)
    wb = weight.astype(jnp.bfloat16).astype(jnp.float32)
    return jnp.einsum("...k,nk->...n", xb, wb) * c + bias


if __name__ == "__main__":
    # EqualizedLinear(in_features=32, out_features=64, bias=0.2); x: (2, 8, 32)
    B, S, in_f, out_f = 2, 8, 32, 64
    bias_init = 0.2

    key = jax.random.PRNGKey(0)
    k_x, k_w = jax.random.split(key, 2)

    x = jax.random.normal(k_x, (B, S, in_f), dtype=jnp.float32)
    weight = jax.random.normal(k_w, (out_f, in_f), dtype=jnp.float32)   # torch.randn init
    bias = jnp.ones((out_f,), dtype=jnp.float32) * bias_init            # ones * bias

    out = equalized_linear_forward(x, weight, bias)
    out = jax.block_until_ready(out)
    assert out.shape == (B, S, out_f), out.shape

    # Tight check: kernel vs. a reference with identical bf16 operand rounding.
    ref_bf16 = jax.block_until_ready(reference_forward_bf16(x, weight, bias))
    np.testing.assert_allclose(np.asarray(out), np.asarray(ref_bf16),
                               rtol=1e-3, atol=1e-3)

    # Sanity check: close to the full-f32 module semantics (bf16 MXU tolerance).
    ref_f32 = jax.block_until_ready(reference_forward_f32(x, weight, bias))
    np.testing.assert_allclose(np.asarray(out), np.asarray(ref_f32),
                               rtol=1e-1, atol=1e-1)

    print("KERNEL_OK")
</pallas_src>

<mosaic_0001>
module attributes {stable_mosaic.version = 11 : i64} {
  func.func @eq_linear_kernel(%arg0: i32, %arg1: i32, %arg2: memref<16x32xbf16, #tpu.memory_space<vmem>>, %arg3: memref<32x128xbf16, #tpu.memory_space<vmem>>, %arg4: memref<1x128xf32, #tpu.memory_space<vmem>>, %arg5: memref<16x128xf32, #tpu.memory_space<vmem>>) attributes {dimension_semantics = [#tpu.dimension_semantics<parallel>, #tpu.dimension_semantics<parallel>], iteration_bounds = array<i64: 1, 1>, scalar_prefetch = 0 : i64, scratch_operands = 0 : i64, tpu.core_type = #tpu.core_type<tc>, window_params = [{transform_indices = @transform_0, window_bounds = array<i64: 16, 32>}, {transform_indices = @transform_1, window_bounds = array<i64: 32, 128>}, {transform_indices = @transform_2, window_bounds = array<i64: 1, 128>}, {transform_indices = @transform_3, window_bounds = array<i64: 16, 128>}]} {
    %c0 = arith.constant 0 : index
    %c0_0 = arith.constant 0 : index
    %0 = vector.load %arg2[%c0, %c0_0] : memref<16x32xbf16, #tpu.memory_space<vmem>>, vector<16x32xbf16>
    %c0_1 = arith.constant 0 : index
    %c0_2 = arith.constant 0 : index
    %1 = vector.load %arg3[%c0_1, %c0_2] : memref<32x128xbf16, #tpu.memory_space<vmem>>, vector<32x128xbf16>
    %cst = arith.constant dense<0.000000e+00> : vector<16x128xf32>
    %2 = tpu.matmul %0, %1, %cst {dimension_numbers = #tpu.dot_dimension_numbers<[1], [0], [0], [1], [0, 0, 1, 1], [], []>} : vector<16x32xbf16>, vector<32x128xbf16>, vector<16x128xf32> -> vector<16x128xf32>
    %cst_3 = arith.constant 0.176776692 : f32
    %3 = vector.broadcast %cst_3 : f32 to vector<16x128xf32>
    %4 = arith.mulf %2, %3 : vector<16x128xf32>
    %c0_4 = arith.constant 0 : index
    %c0_5 = arith.constant 0 : index
    %5 = vector.load %arg4[%c0_4, %c0_5] : memref<1x128xf32, #tpu.memory_space<vmem>>, vector<1x128xf32>
    %6 = vector.broadcast %5 : vector<1x128xf32> to vector<16x128xf32>
    %7 = arith.addf %4, %6 : vector<16x128xf32>
    %c0_6 = arith.constant 0 : index
    %c0_7 = arith.constant 0 : index
    %8 = vector.load %arg5[%c0_6, %c0_7] : memref<16x128xf32, #tpu.memory_space<vmem>>, vector<16x128xf32>
    tpu.vector_store %arg5[%c0_6, %c0_7], %7 {strides = array<i32>} : memref<16x128xf32, #tpu.memory_space<vmem>>, vector<16x128xf32>,
    return
  }
  func.func @transform_0(%arg0: i32, %arg1: i32) -> (i32, i32) {
    %c0_i32 = arith.constant 0 : i32
    %c0_i32_0 = arith.constant 0 : i32
    return %arg0, %c0_i32 : i32, i32
  }
  func.func @transform_1(%arg0: i32, %arg1: i32) -> (i32, i32) {
    %c0_i32 = arith.constant 0 : i32
    %c0_i32_0 = arith.constant 0 : i32
    return %c0_i32, %arg1 : i32, i32
  }
  func.func @transform_2(%arg0: i32, %arg1: i32) -> (i32, i32) {
    %c0_i32 = arith.constant 0 : i32
    %c0_i32_0 = arith.constant 0 : i32
    return %c0_i32, %arg1 : i32, i32
  }
  func.func @transform_3(%arg0: i32, %arg1: i32) -> (i32, i32) {
    %c0_i32 = arith.constant 0 : i32
    return %arg0, %arg1 : i32, i32
  }
}

</mosaic_0001>

<llo_original>
// kernel: equalized_linear_forward.1
$region0: #{equalized_linear_forward.1}
  #allocation0 [shape = 'u32[]', space=smem, size = 0x4, offset = 0x4, fixed_abs, tag = 'smem constant byte address 0x4 - core index']
  #allocation1 [shape = 'u32[144,128]{1,0:T(1,128)}', space=vmem, size = 0x12000, scoped, tag = 'internal scratch']
  %s0 = inlined_call_operand.vmem [shape: bf16[16,32], index: 0, kind: input, shape index: {}]
  %s1 = inlined_call_operand.vmem [shape: bf16[32,128], index: 1, kind: input, shape index: {}]
  %s2 = inlined_call_operand.vmem [shape: f32[1,128], index: 2, kind: input, shape index: {}]
  %s3 = inlined_call_operand.vmem [shape: f32[16,128], index: 3, kind: output, shape index: {}]
  %s4 = sld [smem:[#allocation0]]
  $region22: #{equalized_linear_forward.1} parent=0
    _
  %s6 = ssub.s32 1, %s4
  %s7 = scalar_select 0, %s6, %s4
  // Predicated region
  $region2: #{equalized_linear_forward.1} parent=0 // pred_check
    _
  $region3: #{equalized_linear_forward.1} parent=0 // pred_check_branch
    %9 = sbr.rel (0) target = $region5
  $region4: #{equalized_linear_forward.1} parent=0 // pred_region
    _
  $region5: #{equalized_linear_forward.1} parent=0 // pred_fallthru
    _
  // Predicated region
  $region6: #{equalized_linear_forward.1} parent=0 // pred_check
    _
  $region7: #{equalized_linear_forward.1} parent=0 // pred_check_branch
    %11 = sbr.rel (0) target = $region9
  $region8: #{equalized_linear_forward.1} parent=0 // pred_region
    _
  $region9: #{equalized_linear_forward.1} parent=0 // pred_fallthru
    _
  // Predicated region
  $region10: #{equalized_linear_forward.1} parent=0 // pred_check
    _
  $region11: #{equalized_linear_forward.1} parent=0 // pred_check_branch
    %13 = sbr.rel (0) target = $region13
  $region12: #{equalized_linear_forward.1} parent=0 // pred_region
    _
  $region13: #{equalized_linear_forward.1} parent=0 // pred_fallthru
    _
  %v15 = vld [vmem:[%s0] sm:$0xf]
  %v16 = vld [vmem:[%s0 + $0x4] sm:$0xf]
  %v17 = vld [vmem:[%s1] sm:$0xf]
  %v18 = vld [vmem:[%s1 + $0x4] sm:$0xf]
  %v19 = vld [vmem:[%s1 + $0x8] sm:$0xf]
  %v20 = vld [vmem:[%s1 + $0xc] sm:$0xf]
  %v23 = vunpack.c.l.b16 %v15
  %v24 = vunpack.c.l.b16 %v16
  %v25 = vpack.c.b16 %v24, %v23
  %v30 = vunpack.c.l.b16 %v17
  %v31 = vunpack.c.l.b16 %v18
  %v32 = vunpack.c.l.b16 %v19
  %v33 = vunpack.c.l.b16 %v20
  %v34 = vpack.c.b16 %v31, %v30
  %v35 = vpack.c.b16 %v33, %v32
  %vm38 = vcmask 261120
  %v40 = vsel %vm38, %v25, 0
  %42 = vmatprep.subr.bf16.mxu0 0
  %43 = vmatpush1.bf16.msra.mxu0 0
  %44 = vmatprep.subr.bf16.mxu0 0
  %45 = vmatpush1.bf16.msra.mxu0 0
  %46 = vmatprep.subr.bf16.mxu0 0
  %47 = vmatpush1.bf16.msra.mxu0 0
  %48 = vmatprep.subr.bf16.mxu0 0
  %49 = vmatpush1.bf16.msra.mxu0 0
  %50 = vmatprep.subr.bf16.mxu0 0
  %51 = vmatpush1.bf16.msra.mxu0 0
  %52 = vmatprep.subr.bf16.mxu0 0
  %53 = vmatpush1.bf16.msra.mxu0 0
  %54 = vmatprep.subr.bf16.mxu0 0
  %55 = vmatpush1.bf16.msra.mxu0 %v35
  %56 = vmatprep.subr.bf16.mxu0 0
  %57 = vmatpush1.bf16.msra.mxu0 %v34
  %58 = vmatprep.subr.bf16.mxu0 0
  %59 = vmatpush2.bf16.msra.mxu0 0
  %60 = vmatprep.subr.bf16.mxu0 0
  %61 = vmatpush2.bf16.msra.mxu0 0
  %62 = vmatprep.subr.bf16.mxu0 0
  %63 = vmatpush2.bf16.msra.mxu0 0
  %64 = vmatprep.subr.bf16.mxu0 0
  %65 = vmatpush2.bf16.msra.mxu0 0
  %66 = vmatprep.subr.bf16.mxu0 0
  %67 = vmatpush2.bf16.msra.mxu0 0
  %68 = vmatprep.subr.bf16.mxu0 0
  %69 = vmatpush2.bf16.msra.mxu0 0
  %70 = vmatprep.subr.bf16.mxu0 0
  %71 = vmatpush2.bf16.msra.mxu0 0
  %72 = vmatprep.subr.bf16.mxu0 0
  %73 = vmatpush2.bf16.msra.mxu0 0
  %74 = vmatprep.mubr.bf16.mxu0 0
  %75 = vmatmul.mubr.bf16.gmra.mxu0 %v40
  %v76 = vpop.f32.mrf.mxu0
  %v77 = vadd.f32 0.0, %v76
  %v78 = vpop.f32.mrf.mxu0
  %v79 = vpop.f32.mrf.mxu0
  %v80 = vadd.f32 0.0, %v79
  %v81 = vpop.f32.mrf.mxu0
  %82 = vdwg.mxu0
  %v83 = vmul.f32 %v77, 0.17677669
  %v84 = vmul.f32 %v80, 0.17677669
  %v85 = vld [vmem:[%s2] sm:$0x1]
  %v87 = vlaneseq
  %v88 = vshrl.u32 %v87, 7
  %v89 = vsub.s32 0, %v88
  %v90 = vrot.slane %v85, %v89
  %v92 = vadd.f32 %v83, %v90
  %v93 = vadd.f32 %v84, %v90
  %94 = vst [vmem:[%s3] sm:$0xff] %v92
  %95 = vst [vmem:[%s3 + $0x8] sm:$0xff] %v93
  // Predicated region
  $region14: #{equalized_linear_forward.1} parent=0 // pred_check
    _
  $region15: #{equalized_linear_forward.1} parent=0 // pred_check_branch
    %97 = sbr.rel (0) target = $region17
  $region16: #{equalized_linear_forward.1} parent=0 // pred_region
    _
  $region17: #{equalized_linear_forward.1} parent=0 // pred_fallthru
    _
  // Predicated region
  $region18: #{equalized_linear_forward.1} parent=0 // pred_check
    _
  $region19: #{equalized_linear_forward.1} parent=0 // pred_check_branch
    %99 = sbr.rel (0) target = $region21
  $region20: #{equalized_linear_forward.1} parent=0 // pred_region
    _
  $region21: #{equalized_linear_forward.1} parent=0 // pred_fallthru
    _

</llo_original>
